<compile_context>
chip_gen: v7x
topology: tpu7x:2x2x1
jax: 0.10.0
libtpu: 0.0.40
codegen_flags: <defaults>
</compile_context>

<pallas_src>
import functools
import math

import jax
import jax.numpy as jnp
from jax.experimental import pallas as pl
from jax.experimental.pallas import tpu as pltpu


def _round_up(x, m):
    return ((x + m - 1) // m) * m


# ---------------------------------------------------------------------------
# Kernel 1: fused QKV projection  qkv = h @ [Wq/sqrt(D) | Wk | Wv] + b
# ---------------------------------------------------------------------------
def qkv_proj_kernel(h_ref, w_ref, b_ref, out_ref):
    out_ref[...] = (
        jnp.dot(h_ref[...], w_ref[...], preferred_element_type=jnp.float32)
        + b_ref[...]
    )


# ---------------------------------------------------------------------------
# Kernel 2: masked graph attention
#   grid = (dest-node tiles [parallel], source-node tiles [arbitrary])
# ---------------------------------------------------------------------------
def attn_kernel(q_ref, kt_ref, vt_ref, adjt_ref, cent_ref, out_ref,
                acc_wv, acc_z, *, num_heads, out_dim, tile_v, tile_u):
    # q_ref    : (H, TILE_V, D)   bf16  queries of the destination tile (pre-scaled)
    # kt_ref   : (H, D, TILE_U)   bf16  keys of the source tile (lane-dense)
    # vt_ref   : (H, D, TILE_U)   bf16  values of the source tile (lane-dense)
    # adjt_ref : (TILE_V, TILE_U) bf16  adj^T tile, adjt[v, u] = adj[u, v]
    # cent_ref : (TILE_V, 1)      f32   source centrality of destination nodes
    # out_ref  : (TILE_V, H*D)    f32
    # acc_wv   : (H, TILE_V, D)   f32 scratch accumulator
    # acc_z    : (H, TILE_V, 1)   f32 scratch accumulator
    i = pl.program_id(0)   # destination tile
    j = pl.program_id(1)   # source tile (reduction axis)

    @pl.when(j == 0)
    def _():
        acc_wv[...] = jnp.zeros_like(acc_wv)
        acc_z[...] = jnp.zeros_like(acc_z)

    # Scores: bf16 MXU matmul with f32 accumulation. 1/sqrt(D) is already
    # folded into Q, so no per-element rescale of the (TILE_V, TILE_U) slab.
    s = jnp.einsum('hvd,hdu->hvu', q_ref[...], kt_ref[...],
                   preferred_element_type=jnp.float32)       # (H, TILE_V, TILE_U)

    # exp kept in f32 for v5e portability (no bf16 EUP/VALU there); on v6e/v7x
    # a bf16 exp path would roughly double EUP throughput.
    mask = adjt_ref[...].astype(jnp.float32)                  # (TILE_V, TILE_U)
    s = jnp.exp(jnp.clip(s, -5.0, 5.0)) * mask[None]

    # Extra self-loop edge per node carrying the raw source-centrality score:
    # fold it into the score-matrix diagonal so it flows through the same
    # aggregation matmul and z row-sum.
    dst_ids = i * tile_v + jax.lax.broadcasted_iota(jnp.int32, (tile_v, tile_u), 0)
    src_ids = j * tile_u + jax.lax.broadcasted_iota(jnp.int32, (tile_v, tile_u), 1)
    s = s + jnp.where(dst_ids == src_ids, cent_ref[...], 0.0)[None]

    # z reduction rides the XLU; aggregation uses the MXU (bf16 operands,
    # f32 accumulation into VMEM scratch).
    acc_z[...] += jnp.sum(s, axis=-1, keepdims=True)          # (H, TILE_V, 1)
    acc_wv[...] += jnp.einsum('hvu,hdu->hvd', s.astype(jnp.bfloat16), vt_ref[...],
                              preferred_element_type=jnp.float32)

    @pl.when(j == pl.num_programs(1) - 1)
    def _():
        inv = pl.reciprocal(acc_z[...] + 1e-6, approx=True)   # EUP slot
        # one lane-dense (TILE_V, H*D) store; the tiny per-head loop only runs
        # once per destination tile.
        out_ref[...] = jnp.concatenate(
            [acc_wv[hd] * inv[hd] for hd in range(num_heads)], axis=1)


# ---------------------------------------------------------------------------
# Wrapper
# ---------------------------------------------------------------------------
def multi_head_attention(h, wq, wk, wv, bq, bk, bv, adj, cent, *,
                         num_heads, out_dim, tile_v=256, tile_u=256):
    N, in_dim = h.shape
    H, D = num_heads, out_dim
    HD = H * D
    inv_scale = 1.0 / math.sqrt(D)

    # ---- tile sizes & zero padding (edge tiles stay exact) -----------------
    if N <= max(tile_v, tile_u):
        tile_v = tile_u = _round_up(N, 8)
    n_pad = _round_up(N, math.lcm(tile_v, tile_u))
    pad = n_pad - N
    if pad:
        h = jnp.pad(h, ((0, pad), (0, 0)))
        adj = jnp.pad(adj, ((0, pad), (0, pad)))
        cent = jnp.pad(cent, ((0, pad), (0, 0)))

    # ---- fused QKV projection (one wide MXU matmul, tiled over node rows) --
    # 1/sqrt(D) folded into the Q columns: a one-time constant fold.
    w_qkv = jnp.concatenate([wq * inv_scale, wk, wv], axis=1)     # (in_dim, 3*H*D)
    b_qkv = jnp.concatenate([bq * inv_scale, bk, bv], axis=1)     # (1, 3*H*D)

    tile_n = tile_v                       # n_pad is a multiple of tile_v
    qkv = pl.pallas_call(
        qkv_proj_kernel,
        out_shape=jax.ShapeDtypeStruct((n_pad, 3 * HD), jnp.float32),
        grid=(n_pad // tile_n,),
        in_specs=[
            pl.BlockSpec((tile_n, in_dim), lambda i: (i, 0)),
            pl.BlockSpec((in_dim, 3 * HD), lambda i: (0, 0)),
            pl.BlockSpec((1, 3 * HD), lambda i: (0, 0)),
        ],
        out_specs=pl.BlockSpec((tile_n, 3 * HD), lambda i: (i, 0)),
        compiler_params=pltpu.CompilerParams(
            dimension_semantics=("parallel",)),
    )(h, w_qkv, b_qkv)

    q = qkv[:, :HD]
    k = qkv[:, HD:2 * HD]
    v = qkv[:, 2 * HD:]

    # Head-major / lane-dense layouts + bf16 casts, built once in XLA.
    # (O(N*H*D) traffic -- negligible next to the O(N^2) adjacency stream;
    # fusing this into the projection kernel would need in-kernel transposes.)
    q_hm = q.reshape(n_pad, H, D).transpose(1, 0, 2).astype(jnp.bfloat16)   # (H, N, D)
    k_t = k.reshape(n_pad, H, D).transpose(1, 2, 0).astype(jnp.bfloat16)    # (H, D, N)
    v_t = v.reshape(n_pad, H, D).transpose(1, 2, 0).astype(jnp.bfloat16)    # (H, D, N)
    adj_t = adj.T.astype(jnp.bfloat16)                                      # dest-major, bf16
    cent_f = cent.astype(jnp.float32)

    grid = (n_pad // tile_v, n_pad // tile_u)
    out = pl.pallas_call(
        functools.partial(attn_kernel, num_heads=H, out_dim=D,
                          tile_v=tile_v, tile_u=tile_u),
        out_shape=jax.ShapeDtypeStruct((n_pad, HD), jnp.float32),
        grid=grid,
        in_specs=[
            pl.BlockSpec((H, tile_v, D), lambda i, j: (0, i, 0)),     # Q (dest tile)
            pl.BlockSpec((H, D, tile_u), lambda i, j: (0, 0, j)),     # K^T (src tile)
            pl.BlockSpec((H, D, tile_u), lambda i, j: (0, 0, j)),     # V^T (src tile)
            pl.BlockSpec((tile_v, tile_u), lambda i, j: (i, j)),      # adj^T tile
            pl.BlockSpec((tile_v, 1), lambda i, j: (i, 0)),           # centrality
        ],
        out_specs=pl.BlockSpec((tile_v, HD), lambda i, j: (i, 0)),
        scratch_shapes=[
            pltpu.VMEM((H, tile_v, D), jnp.float32),    # wV accumulator
            pltpu.VMEM((H, tile_v, 1), jnp.float32),    # z accumulator
        ],
        compiler_params=pltpu.CompilerParams(
            dimension_semantics=("parallel", "arbitrary"),
            vmem_limit_bytes=48 * 1024 * 1024),
    )(q_hm, k_t, v_t, adj_t, cent_f)

    return out[:N].reshape(N, H, D)


# ---------------------------------------------------------------------------
# Pure-JAX reference (mirrors the PyTorch/DGL semantics)
# ---------------------------------------------------------------------------
def reference(h, wq, wk, wv, bq, bk, bv, adj, cent, *, num_heads, out_dim):
    N = h.shape[0]
    Q = (h @ wq + bq).reshape(N, num_heads, out_dim)
    K = (h @ wk + bk).reshape(N, num_heads, out_dim)
    V = (h @ wv + bv).reshape(N, num_heads, out_dim)
    s = jnp.einsum('uhd,vhd->uvh', K, Q) / math.sqrt(out_dim)
    s = jnp.exp(jnp.clip(s, -5.0, 5.0)) * adj[:, :, None]
    wV = jnp.einsum('uvh,uhd->vhd', s, V) + cent[:, :, None] * V
    z = jnp.sum(s, axis=0)[:, :, None] + cent[:, :, None]
    return wV / (z + 1e-6)


if __name__ == "__main__":
    N, in_dim, out_dim, num_heads = 8, 32, 16, 4
    HD = num_heads * out_dim

    key = jax.random.PRNGKey(0)
    k_h, k_wq, k_wk, k_wv, k_bq, k_bk, k_bv, k_adj, k_c = jax.random.split(key, 9)

    h = jax.random.normal(k_h, (N, in_dim), dtype=jnp.float32)
    scale = 1.0 / math.sqrt(in_dim)
    wq = jax.random.uniform(k_wq, (in_dim, HD), jnp.float32, -scale, scale)
    wk = jax.random.uniform(k_wk, (in_dim, HD), jnp.float32, -scale, scale)
    wv = jax.random.uniform(k_wv, (in_dim, HD), jnp.float32, -scale, scale)
    bq = jax.random.uniform(k_bq, (1, HD), jnp.float32, -scale, scale)
    bk = jax.random.uniform(k_bk, (1, HD), jnp.float32, -scale, scale)
    bv = jax.random.uniform(k_bv, (1, HD), jnp.float32, -scale, scale)

    # deterministic random directed graph (adj[u, v] = 1 for edge u->v)
    adj = jax.random.bernoulli(k_adj, 0.4, (N, N)).astype(jnp.float32)
    # per-node source centrality (positive scalars)
    cent = jax.random.uniform(k_c, (N, 1), jnp.float32, 0.1, 1.0)

    out = multi_head_attention(h, wq, wk, wv, bq, bk, bv, adj, cent,
                               num_heads=num_heads, out_dim=out_dim)
    out = jax.block_until_ready(out)

    ref = reference(h, wq, wk, wv, bq, bk, bv, adj, cent,
                    num_heads=num_heads, out_dim=out_dim)
    assert out.shape == (N, num_heads, out_dim)
    # tolerance accounts for the bf16 score/aggregation path (~0.4-0.8% rel)
    # plus the approximate (EUP) reciprocal in the final normalization.
    assert jnp.allclose(out, ref, atol=2e-2, rtol=2e-2), "mismatch vs reference"

    print("KERNEL_OK")
</pallas_src>

<mosaic_0001>
module attributes {stable_mosaic.version = 11 : i64} {
  func.func @qkv_proj_kernel(%arg0: i32, %arg1: memref<8x32xf32, #tpu.memory_space<vmem>>, %arg2: memref<32x192xf32, #tpu.memory_space<vmem>>, %arg3: memref<1x192xf32, #tpu.memory_space<vmem>>, %arg4: memref<8x192xf32, #tpu.memory_space<vmem>>) attributes {dimension_semantics = [#tpu.dimension_semantics<parallel>], iteration_bounds = array<i64: 1>, scalar_prefetch = 0 : i64, scratch_operands = 0 : i64, tpu.core_type = #tpu.core_type<tc>, window_params = [{transform_indices = @transform_0, window_bounds = array<i64: 8, 32>}, {pipeline_mode = #tpu.pipeline_mode<synchronous>, transform_indices = @transform_1, window_bounds = array<i64: 32, 192>}, {pipeline_mode = #tpu.pipeline_mode<synchronous>, transform_indices = @transform_2, window_bounds = array<i64: 1, 192>}, {transform_indices = @transform_3, window_bounds = array<i64: 8, 192>}]} {
    %c0 = arith.constant 0 : index
    %c0_0 = arith.constant 0 : index
    %0 = vector.load %arg1[%c0, %c0_0] : memref<8x32xf32, #tpu.memory_space<vmem>>, vector<8x32xf32>
    %c0_1 = arith.constant 0 : index
    %c0_2 = arith.constant 0 : index
    %1 = vector.load %arg2[%c0_1, %c0_2] : memref<32x192xf32, #tpu.memory_space<vmem>>, vector<32x192xf32>
    %cst = arith.constant dense<0.000000e+00> : vector<8x192xf32>
    %2 = tpu.matmul %0, %1, %cst {dimension_numbers = #tpu.dot_dimension_numbers<[1], [0], [0], [1], [0, 0, 1, 1], [], []>} : vector<8x32xf32>, vector<32x192xf32>, vector<8x192xf32> -> vector<8x192xf32>
    %c0_3 = arith.constant 0 : index
    %c0_4 = arith.constant 0 : index
    %3 = vector.load %arg3[%c0_3, %c0_4] : memref<1x192xf32, #tpu.memory_space<vmem>>, vector<1x192xf32>
    %4 = vector.broadcast %3 : vector<1x192xf32> to vector<8x192xf32>
    %5 = arith.addf %2, %4 : vector<8x192xf32>
    %c0_5 = arith.constant 0 : index
    %c0_6 = arith.constant 0 : index
    %6 = vector.load %arg4[%c0_5, %c0_6] : memref<8x192xf32, #tpu.memory_space<vmem>>, vector<8x192xf32>
    tpu.vector_store %arg4[%c0_5, %c0_6], %5 {strides = array<i32>} : memref<8x192xf32, #tpu.memory_space<vmem>>, vector<8x192xf32>,
    return
  }
  func.func @transform_0(%arg0: i32) -> (i32, i32) {
    %c0_i32 = arith.constant 0 : i32
    %c0_i32_0 = arith.constant 0 : i32
    return %arg0, %c0_i32 : i32, i32
  }
  func.func @transform_1(%arg0: i32) -> (i32, i32) {
    %c0_i32 = arith.constant 0 : i32
    %c0_i32_0 = arith.constant 0 : i32
    %c0_i32_1 = arith.constant 0 : i32
    return %c0_i32, %c0_i32_0 : i32, i32
  }
  func.func @transform_2(%arg0: i32) -> (i32, i32) {
    %c0_i32 = arith.constant 0 : i32
    %c0_i32_0 = arith.constant 0 : i32
    %c0_i32_1 = arith.constant 0 : i32
    return %c0_i32, %c0_i32_0 : i32, i32
  }
  func.func @transform_3(%arg0: i32) -> (i32, i32) {
    %c0_i32 = arith.constant 0 : i32
    %c0_i32_0 = arith.constant 0 : i32
    return %arg0, %c0_i32 : i32, i32
  }
}

</mosaic_0001>

<llo_original>
// kernel: tpu_custom_call.1
$region0: #{tpu_custom_call.1}
  #allocation0 [shape = 'u32[]', space=smem, size = 0x4, offset = 0x4, fixed_abs, tag = 'smem constant byte address 0x4 - core index']
  #allocation1 [shape = 'u32[144,128]{1,0:T(1,128)}', space=vmem, size = 0x12000, scoped, tag = 'internal scratch']
  %s0 = inlined_call_operand.hbm [shape: f32[8,32], index: 0, kind: input, shape index: {}]
  %s1 = inlined_call_operand.hbm [shape: f32[32,192], index: 1, kind: input, shape index: {}]
  %s2 = inlined_call_operand.vmem [shape: f32[1,192], index: 2, kind: input, shape index: {}]
  %s3 = inlined_call_operand.hbm [shape: f32[8,192], index: 3, kind: output, shape index: {}]
  %s4 = sld [smem:[#allocation0]]
  $region30: #{tpu_custom_call.1} parent=0
    _
  %s6 = ssub.s32 1, %s4
  %s7 = scalar_select 0, %s6, %s4
  $region1: #{tpu_custom_call.1} parent=0
    #allocation2 [shape = 'u8[4096]{0}', space=vmem, size = 0x1000, scoped, tag = 'input window, operand 0, single buffered']
    #allocation3 [shape = 's32[1]{0}', space=sflag, size = 0x4, scoped, tag = 'scoped memory for tpu_custom_call.1']
    #allocation4 [shape = 's32[1]{0}', space=sflag, size = 0x4, scoped, tag = 'scoped memory for tpu_custom_call.1']
    #allocation5 [shape = 'u8[32768]{0}', space=vmem, size = 0x8000, scoped, tag = 'input window, operand 1, single buffered']
    #allocation6 [shape = 's32[1]{0}', space=sflag, size = 0x4, scoped, tag = 'scoped memory for tpu_custom_call.1']
    #allocation7 [shape = 'u8[8192]{0}', space=vmem, size = 0x2000, scoped, tag = 'output window, operand 0, single buffered']
    %8 = vsyncpa [#allocation3], 0
    %9 = vsyncpa [#allocation6], 0
    %10 = vsyncpa [#allocation4], 0
    // Predicated region
    $region2: #{tpu_custom_call.1} parent=1 // pred_check
      _
    $region3: #{tpu_custom_call.1} parent=1 // pred_check_branch
      %12 = sbr.rel (0) target = $region5
    $region4: #{tpu_custom_call.1} parent=1 // pred_region
      %s14 = ssub.s32 128, 128
      %15 = vsyncadd [#allocation3], %s14
      %s17 = sshll.u32 [#allocation2], 4
      %s18 = int_to_ptr.vmem [resolvable:$true] %s17
      %20 = dma.hbm_to_vmem [thread:$0]  %s0, 128, %s18, [#allocation3]
    $region5: #{tpu_custom_call.1} parent=1 // pred_fallthru
      _
    // Predicated region
    $region6: #{tpu_custom_call.1} parent=1 // pred_check
      _
    $region7: #{tpu_custom_call.1} parent=1 // pred_check_branch
      %22 = sbr.rel (0) target = $region9
    $region8: #{tpu_custom_call.1} parent=1 // pred_region
      %s24 = ssub.s32 1024, 1024
      %25 = vsyncadd [#allocation6], %s24
      %s26 = sshll.u32 [#allocation5], 4
      %s27 = int_to_ptr.vmem [resolvable:$true] %s26
      %32 = dma.hbm_to_vmem [thread:$0]  %s1, 1024, %s27, [#allocation6], 256, 256, 16
    $region9: #{tpu_custom_call.1} parent=1 // pred_fallthru
      _
    // Predicated region
    $region10: #{tpu_custom_call.1} parent=1 // pred_check
      _
    $region11: #{tpu_custom_call.1} parent=1 // pred_check_branch
      %34 = sbr.rel (0) target = $region13
    $region12: #{tpu_custom_call.1} parent=1 // pred_region
      _
    $region13: #{tpu_custom_call.1} parent=1 // pred_fallthru
      _
    // Predicated region
    $region14: #{tpu_custom_call.1} parent=1 // pred_check
      _
    $region15: #{tpu_custom_call.1} parent=1 // pred_check_branch
      %36 = sbr.rel (0) target = $region17
    $region16: #{tpu_custom_call.1} parent=1 // pred_region
      %37 = dma.done [#allocation3], 128
    $region17: #{tpu_custom_call.1} parent=1 // pred_fallthru
      _
    // Predicated region
    $region18: #{tpu_custom_call.1} parent=1 // pred_check
      _
    $region19: #{tpu_custom_call.1} parent=1 // pred_check_branch
      %39 = sbr.rel (0) target = $region21
    $region20: #{tpu_custom_call.1} parent=1 // pred_region
      %40 = dma.done [#allocation6], 1024
    $region21: #{tpu_custom_call.1} parent=1 // pred_fallthru
      _
    %v41 = vld [vmem:[#allocation2] sm:$0xff]
    %v42 = vld [vmem:[#allocation5] sm:$0xff]
    %v43 = vld [vmem:[#allocation5 + $0x8] sm:$0xff]
    %v44 = vld [vmem:[#allocation5 + $0x10] sm:$0xff]
    %v45 = vld [vmem:[#allocation5 + $0x18] sm:$0xff]
    %v46 = vld [vmem:[#allocation5 + $0x20] sm:$0xff]
    %v47 = vld [vmem:[#allocation5 + $0x28] sm:$0xff]
    %v48 = vld [vmem:[#allocation5 + $0x30] sm:$0xff]
    %v49 = vld [vmem:[#allocation5 + $0x38] sm:$0xff]
    %v50 = vld [vmem:[%s2] sm:$0x3]
    %v52 = vlaneseq
    %v53 = vshrl.u32 %v52, 7
    %v54 = vsub.s32 0, %v53
    %v55 = vrot.slane %v50, %v54
    %v56 = vlaneseq
    %v57 = vshrl.u32 %v56, 7
    %v58 = vsub.s32 1, %v57
    %v59 = vrot.slane %v50, %v58
    %vm62 = vcmask 261120
    %v64 = vsel %vm62, %v41, 0
    %66 = vmatprep.subr.mxu0 %v43
    %67 = vmatpush1.msra.mxu0 %v42
    %68 = vmatprep.subr.mxu0 %v45
    %69 = vmatpush1.msra.mxu0 %v44
    %70 = vmatprep.subr.mxu0 %v47
    %71 = vmatpush1.msra.mxu0 %v46
    %72 = vmatprep.subr.mxu0 %v49
    %73 = vmatpush1.msra.mxu0 %v48
    %74 = vmatprep.subr.mxu0 0.0
    %75 = vmatpush1.msra.mxu0 0.0
    %76 = vmatprep.subr.mxu0 0.0
    %77 = vmatpush1.msra.mxu0 0.0
    %78 = vmatprep.subr.mxu0 0.0
    %79 = vmatpush1.msra.mxu0 0.0
    %80 = vmatprep.subr.mxu0 0.0
    %81 = vmatpush1.msra.mxu0 0.0
    %82 = vmatprep.subr.mxu0 0.0
    %83 = vmatpush1.msra.mxu0 0.0
    %84 = vmatprep.subr.mxu0 0.0
    %85 = vmatpush1.msra.mxu0 0.0
    %86 = vmatprep.subr.mxu0 0.0
    %87 = vmatpush1.msra.mxu0 0.0
    %88 = vmatprep.subr.mxu0 0.0
    %89 = vmatpush1.msra.mxu0 0.0
    %90 = vmatprep.subr.mxu0 0.0
    %91 = vmatpush1.msra.mxu0 0.0
    %92 = vmatprep.subr.mxu0 0.0
    %93 = vmatpush1.msra.mxu0 0.0
    %94 = vmatprep.subr.mxu0 0.0
    %95 = vmatpush1.msra.mxu0 0.0
    %96 = vmatprep.subr.mxu0 0.0
    %97 = vmatpush1.msra.mxu0 0.0
    %98 = vmatprep.subr.mxu0 0.0
    %99 = vmatpush1.msra.mxu0 0.0
    %100 = vmatprep.subr.mxu0 0.0
    %101 = vmatpush1.msra.mxu0 0.0
    %102 = vmatprep.subr.mxu0 0.0
    %103 = vmatpush1.msra.mxu0 0.0
    %104 = vmatprep.subr.mxu0 0.0
    %105 = vmatpush1.msra.mxu0 0.0
    %106 = vmatprep.subr.mxu0 0.0
    %107 = vmatpush1.msra.mxu0 0.0
    %108 = vmatprep.subr.mxu0 0.0
    %109 = vmatpush1.msra.mxu0 0.0
    %110 = vmatprep.subr.mxu0 0.0
    %111 = vmatpush1.msra.mxu0 0.0
    %112 = vmatprep.subr.mxu0 0.0
    %113 = vmatpush1.msra.mxu0 0.0
    %114 = vmatprep.subr.mxu0 0.0
    %115 = vmatpush1.msra.mxu0 0.0
    %116 = vmatprep.subr.mxu0 0.0
    %117 = vmatpush1.msra.mxu0 0.0
    %118 = vmatprep.subr.mxu0 0.0
    %119 = vmatpush1.msra.mxu0 0.0
    %120 = vmatprep.subr.mxu0 0.0
    %121 = vmatpush1.msra.mxu0 0.0
    %122 = vmatprep.subr.mxu0 0.0
    %123 = vmatpush1.msra.mxu0 0.0
    %124 = vmatprep.subr.mxu0 0.0
    %125 = vmatpush1.msra.mxu0 0.0
    %126 = vmatprep.subr.mxu0 0.0
    %127 = vmatpush1.msra.mxu0 0.0
    %128 = vmatprep.subr.mxu0 0.0
    %129 = vmatpush1.msra.mxu0 0.0
    %130 = vmatprep.mubr.f32.mxu0 0.0
    %131 = vmatmul.mubr.f32.gmra.mrb[0].mxu0 %v64
    %v132 = vpop.f32.mrb[0].mxu0
    %v133 = vadd.f32 %v55, %v132
    %v134 = vpop.f32.mrb[0].mxu0
    %v135 = vadd.f32 %v59, %v134
    %136 = vdwg.mxu0
    %137 = vst [vmem:[#allocation7] sm:$0xff] %v133
    %vm138 = vcmask 523264
    %139 = vst.msk [vmem:[#allocation7 + $0x8] sm:$0xff] %vm138, %v135
    // Predicated region
    $region22: #{tpu_custom_call.1} parent=1 // pred_check
      _
    $region23: #{tpu_custom_call.1} parent=1 // pred_check_branch
      %141 = sbr.rel (0) target = $region25
    $region24: #{tpu_custom_call.1} parent=1 // pred_region
      %s143 = ssub.s32 256, 256
      %144 = vsyncadd [#allocation4], %s143
      %s146 = sshll.u32 [#allocation7], 4
      %s147 = int_to_ptr.vmem [resolvable:$true] %s146
      %149 = dma.vmem_to_hbm [thread:$0]  %s147, 256, %s3, [#allocation4]
    $region25: #{tpu_custom_call.1} parent=1 // pred_fallthru
      _
    // Predicated region
    $region26: #{tpu_custom_call.1} parent=1 // pred_check
      _
    $region27: #{tpu_custom_call.1} parent=1 // pred_check_branch
      %151 = sbr.rel (0) target = $region29
    $region28: #{tpu_custom_call.1} parent=1 // pred_region
      %152 = dma.done [#allocation4], 256
    $region29: #{tpu_custom_call.1} parent=1 // pred_fallthru
      _
    %153 = vsyncpa [#allocation3], 1
    %154 = vsyncpa [#allocation6], 1
    %155 = vsyncpa [#allocation4], 1

</llo_original>
